<compile_context>
chip_gen: v7x
topology: tpu7x:2x2x1
jax: 0.10.0
libtpu: 0.0.40
codegen_flags: <defaults>
</compile_context>

<pallas_src>
import functools
from typing import NamedTuple

import jax
import jax.numpy as jnp
import numpy as np
from jax.experimental import pallas as pl
from jax.experimental.pallas import tpu as pltpu

_LANE = 128
_SUBLANE = 8


def _round_up(x, m):
    return ((x + m - 1) // m) * m


def _cdiv(a, b):
    return (a + b - 1) // b


class ProposalConfig(NamedTuple):
    in_dim: int
    in_pad: int
    hid_pad: int
    d: int
    d_pad: int
    k: int
    k_pad: int
    kd: int
    kd_pad: int


class ProposalParams(NamedTuple):
    w1: jax.Array    # (in_pad, hid_pad), matmul dtype
    b1: jax.Array    # (1, hid_pad), f32
    w2: jax.Array    # (hid_pad, 2*kd_pad + k_pad), matmul dtype  [means|stddevs|coeffs]
    b2: jax.Array    # (1, 2*kd_pad + k_pad), f32 (-1e30 baked into padded coeff lanes)
    sel: jax.Array   # (d_pad, kd_pad), f32 selection matrix tiling D -> K*D


# ----------------------------- Pallas kernel -------------------------------
def _proposal_kernel(kd_pad,
                     x_ref, w1_ref, b1_ref, w2_ref, b2_ref, sel_ref,
                     low_ref, high_ref,
                     means_ref, std_ref, logc_ref):
    # ---- layer 1: Linear -> ReLU (MXU, f32 accumulation) ----
    h = jnp.dot(x_ref[...], w1_ref[...],
                preferred_element_type=jnp.float32) + b1_ref[...]
    h = jnp.maximum(h, 0.0).astype(w2_ref.dtype)   # feed MXU in the weight dtype

    # ---- layer 2: ONE fused matmul over [means | stddevs | coeffs], then
    #      lane-aligned (multiple-of-128) slices of the result (free) ----
    y = jnp.dot(h, w2_ref[...], preferred_element_type=jnp.float32) + b2_ref[...]
    means_raw = y[:, :kd_pad]
    std_raw = y[:, kd_pad:2 * kd_pad]
    coeffs = y[:, 2 * kd_pad:]          # (tb, k_pad); padded lanes already -1e30 via bias

    # ---- tile prior low/high from D lanes to K*D lanes in-kernel.
    # sel is an exact 0/1 selection matrix, so the f32 matmul reproduces the values
    # (to within f32 rounding) without streaming K-times-larger tensors from HBM. ----
    lows = jnp.dot(low_ref[...], sel_ref[...], preferred_element_type=jnp.float32)
    highs = jnp.dot(high_ref[...], sel_ref[...], preferred_element_type=jnp.float32)
    prior_range = highs - lows

    # softplus (matches torch.nn.Softplus: linear above threshold=20)
    std = jnp.where(std_raw > 20.0, std_raw,
                    jnp.log1p(jnp.exp(jnp.minimum(std_raw, 20.0))))

    # log_softmax over mixture coefficients; padded lanes carry -1e30 (baked into the
    # bias) so exp() underflows to 0 in f32 and they never affect the reduction.
    m = jnp.max(coeffs, axis=1, keepdims=True)
    shifted = coeffs - m
    logc = shifted - jnp.log(jnp.sum(jnp.exp(shifted), axis=1, keepdims=True))

    # affine map of means into prior support + clamp
    means = jnp.minimum(jnp.maximum(lows + means_raw * prior_range, lows - 1000000.0),
                        highs + 1000000.0)

    means_ref[...] = means
    std_ref[...] = std
    logc_ref[...] = logc


# ------------------- one-time (model-load) parameter prep -------------------
def prepare_params(w1, b1, w2, b2, *, mixture_components, output_dim,
                   matmul_dtype=jnp.bfloat16):
    """Pad / split / cast the FF weights once on the host so the per-call path never
    re-reads or re-writes them in HBM."""
    k, d = int(mixture_components), int(output_dim)
    kd = k * d
    w1 = np.asarray(w1, np.float32)
    b1 = np.asarray(b1, np.float32)
    w2 = np.asarray(w2, np.float32)
    b2 = np.asarray(b2, np.float32)
    in_dim, hid = w1.shape
    assert w2.shape == (hid, (2 * d + 1) * k)

    in_pad = _round_up(in_dim, _LANE)
    hid_pad = _round_up(hid, _LANE)
    kd_pad = _round_up(kd, _LANE)
    k_pad = _round_up(k, _LANE)
    d_pad = _round_up(d, _LANE)
    n2_pad = 2 * kd_pad + k_pad

    w1p = np.zeros((in_pad, hid_pad), np.float32)
    w1p[:in_dim, :hid] = w1
    b1p = np.zeros((1, hid_pad), np.float32)
    b1p[0, :hid] = b1

    # Fused, lane-aligned second layer: [means | stddevs | coeffs] segments.
    w2p = np.zeros((hid_pad, n2_pad), np.float32)
    w2p[:hid, 0:kd] = w2[:, 0:kd]
    w2p[:hid, kd_pad:kd_pad + kd] = w2[:, kd:2 * kd]
    w2p[:hid, 2 * kd_pad:2 * kd_pad + k] = w2[:, 2 * kd:2 * kd + k]
    b2p = np.zeros((1, n2_pad), np.float32)
    b2p[0, 0:kd] = b2[0:kd]
    b2p[0, kd_pad:kd_pad + kd] = b2[kd:2 * kd]
    b2p[0, 2 * kd_pad:2 * kd_pad + k] = b2[2 * kd:2 * kd + k]
    # Bake the coefficient lane mask into the bias: padded weight columns contribute 0,
    # so after the bias add coeffs[:, k:] == -1e30 (no in-kernel iota/select needed).
    b2p[0, 2 * kd_pad + k:] = -1e30

    # Selection matrix tiling a (B, D) row to (B, K*D) lanes: sel[j, i*D + j] = 1.
    sel = np.zeros((d_pad, kd_pad), np.float32)
    for i in range(k):
        sel[np.arange(d), i * d + np.arange(d)] = 1.0

    params = ProposalParams(
        w1=jnp.asarray(w1p, matmul_dtype),
        b1=jnp.asarray(b1p),
        w2=jnp.asarray(w2p, matmul_dtype),
        b2=jnp.asarray(b2p),
        sel=jnp.asarray(sel),
    )
    cfg = ProposalConfig(in_dim=in_dim, in_pad=in_pad, hid_pad=hid_pad,
                         d=d, d_pad=d_pad, k=k, k_pad=k_pad, kd=kd, kd_pad=kd_pad)
    return params, cfg


# ------------------------------ batch tiling --------------------------------
def _choose_tile_b(batch, tile_b, min_tiles=2):
    """Adaptive batch tile: multiple of 8, <= tile_b, rows spread evenly over the tiles
    (keeps zero-row padding < 1 sublane group per tile), and >= min_tiles grid steps
    whenever the batch allows it so ("parallel",) can shard across v7x's two TCs."""
    b8 = _round_up(batch, _SUBLANE)
    tb = min(_round_up(tile_b, _SUBLANE), b8)
    if b8 >= min_tiles * _SUBLANE:
        tb = min(tb, _round_up(_cdiv(b8, min_tiles), _SUBLANE))
    n_tiles = _cdiv(b8, tb)
    tb = _round_up(_cdiv(b8, n_tiles), _SUBLANE)
    return tb, n_tiles * tb


# ------------------------------ forward pass ---------------------------------
def proposal_forward_padded(params, x, prior_low, prior_high, *, cfg, tile_b=512):
    """Preferred (performance) entry point: returns batch/lane-PADDED outputs
    (b_pad, kd_pad)/(b_pad, k_pad); consumers should mask/slice inside their own jit
    so no standalone HBM compaction pass is paid."""
    batch = x.shape[0]
    mdt = params.w1.dtype

    x_flat = x.reshape(batch, -1).astype(jnp.float32)        # glue: flatten NCHW
    assert x_flat.shape[1] == cfg.in_dim

    tb, b_pad = _choose_tile_b(batch, tile_b)
    grid = (b_pad // tb,)

    xp = jnp.pad(x_flat, ((0, b_pad - batch), (0, cfg.in_pad - cfg.in_dim))).astype(mdt)
    low_p = jnp.pad(prior_low.reshape(batch, -1).astype(jnp.float32),
                    ((0, b_pad - batch), (0, cfg.d_pad - cfg.d)))
    high_p = jnp.pad(prior_high.reshape(batch, -1).astype(jnp.float32),
                     ((0, b_pad - batch), (0, cfg.d_pad - cfg.d)))

    n2_pad = 2 * cfg.kd_pad + cfg.k_pad
    # Resident weight blocks (constant index map -> fetched once). They are tiny here
    # (<0.2 MiB), so default double-buffering is harmless.
    # TODO(synk): for large in_dim/hidden_dim, single-buffer these constant blocks
    # (pipeline_mode=pl.Buffered(1)) to free VMEM headroom on v7x's 64 MiB.
    rep = lambda shape: pl.BlockSpec(shape, lambda i: (0, 0))
    batch_blk = lambda w: pl.BlockSpec((tb, w), lambda i: (i, 0))

    out_shapes = (
        jax.ShapeDtypeStruct((b_pad, cfg.kd_pad), jnp.float32),   # means
        jax.ShapeDtypeStruct((b_pad, cfg.kd_pad), jnp.float32),   # stddevs
        jax.ShapeDtypeStruct((b_pad, cfg.k_pad), jnp.float32),    # log mixture coeffs
    )

    means_p, std_p, logc_p = pl.pallas_call(
        functools.partial(_proposal_kernel, cfg.kd_pad),
        out_shape=out_shapes,
        grid_spec=pltpu.PrefetchScalarGridSpec(
            num_scalar_prefetch=0,
            grid=grid,
            in_specs=[
                batch_blk(cfg.in_pad),              # x
                rep((cfg.in_pad, cfg.hid_pad)),     # w1
                rep((1, cfg.hid_pad)),              # b1
                rep((cfg.hid_pad, n2_pad)),         # w2  [means|stddevs|coeffs] fused
                rep((1, n2_pad)),                   # b2  (coeff mask baked in)
                rep((cfg.d_pad, cfg.kd_pad)),       # selection matrix (D -> K*D)
                batch_blk(cfg.d_pad),               # prior low  (untiled, D lanes)
                batch_blk(cfg.d_pad),               # prior high (untiled, D lanes)
            ],
            out_specs=[
                batch_blk(cfg.kd_pad),              # means
                batch_blk(cfg.kd_pad),              # stddevs
                batch_blk(cfg.k_pad),               # log coeffs
            ],
        ),
        compiler_params=pltpu.CompilerParams(
            dimension_semantics=("parallel",),      # v7x: shard batch tiles over both TCs
            vmem_limit_bytes=32 * 1024 * 1024,      # explicit; far under 64 MiB v7x VMEM
        ),
    )(xp, params.w1, params.b1, params.w2, params.b2, params.sel, low_p, high_p)

    return means_p, std_p, logc_p


def proposal_forward(params, x, prior_low, prior_high, *, cfg, tile_b=512):
    """Convenience entry point with logical (B, K*D)/(B, K) shapes.  Inline into the
    surrounding model jit so the slices fuse instead of paying an extra HBM pass."""
    means_p, std_p, logc_p = proposal_forward_padded(
        params, x, prior_low, prior_high, cfg=cfg, tile_b=tile_b)
    b = x.shape[0]
    return (means_p[:b, :cfg.kd], std_p[:b, :cfg.kd], logc_p[:b, :cfg.k])


# --------------------------- pure-JAX reference -----------------------------
def _reference(x, w1, b1, w2, b2, prior_low, prior_high, k, d):
    b = x.shape[0]
    xf = x.reshape(b, -1).astype(jnp.float32)
    h = jnp.maximum(xf @ w1 + b1, 0.0)
    y = h @ w2 + b2
    kd = k * d
    means_raw, std_raw, coeffs = y[:, :kd], y[:, kd:2 * kd], y[:, 2 * kd:]
    lows = jnp.tile(prior_low.reshape(b, -1), (1, k))
    highs = jnp.tile(prior_high.reshape(b, -1), (1, k))
    std = jax.nn.softplus(std_raw)
    logc = jax.nn.log_softmax(coeffs, axis=1)
    means = jnp.minimum(jnp.maximum(lows + means_raw * (highs - lows),
                                    lows - 1e6), highs + 1e6)
    return means, std, logc


# ------------------------------- demo --------------------------------------
if __name__ == "__main__":
    # Small shapes consistent with the module:
    B, C, H, W = 2, 4, 4, 4          # x: NCHW observation embedding input
    IN = C * H * W                   # 64 (flattened input dim)
    D = 2                            # output_dim = prod(output_shape)
    K = 10                           # mixture_components (module default)
    HID = 32                         # hidden_dim (chosen explicitly)
    FF_OUT = (2 * D + 1) * K         # 50

    key = jax.random.PRNGKey(0)
    kx, kw1, kb1, kw2, kb2, kl, kh = jax.random.split(key, 7)

    x = jax.random.normal(kx, (B, C, H, W), dtype=jnp.float32)
    # Deterministic synthetic parameters (torch.nn.Linear-like scale), stored as (in, out).
    w1 = jax.random.uniform(kw1, (IN, HID), jnp.float32, -1.0, 1.0) / jnp.sqrt(IN)
    b1 = jax.random.uniform(kb1, (HID,), jnp.float32, -1.0, 1.0) / jnp.sqrt(IN)
    w2 = jax.random.uniform(kw2, (HID, FF_OUT), jnp.float32, -1.0, 1.0) / jnp.sqrt(HID)
    b2 = jax.random.uniform(kb2, (FF_OUT,), jnp.float32, -1.0, 1.0) / jnp.sqrt(HID)
    # Batched prior Uniform(low, high) parameters, shape (B, D), low < high.
    prior_low = jax.random.uniform(kl, (B, D), jnp.float32, -2.0, 0.0)
    prior_high = prior_low + jax.random.uniform(kh, (B, D), jnp.float32, 0.5, 2.0)

    r_means, r_std, r_logc = _reference(x, w1, b1, w2, b2, prior_low, prior_high, K, D)

    fwd = jax.jit(proposal_forward, static_argnames=("cfg", "tile_b"))

    # ---- f32 MXU path: matches the f32 reference tightly ----
    params32, cfg = prepare_params(w1, b1, w2, b2, mixture_components=K, output_dim=D,
                                   matmul_dtype=jnp.float32)
    means32, std32, logc32 = fwd(params32, x, prior_low, prior_high, cfg=cfg)
    jax.block_until_ready((means32, std32, logc32))
    assert means32.shape == (B, K * D) and std32.shape == (B, K * D)
    assert logc32.shape == (B, K)
    np.testing.assert_allclose(np.asarray(means32), np.asarray(r_means), rtol=1e-5, atol=1e-5)
    np.testing.assert_allclose(np.asarray(std32), np.asarray(r_std), rtol=1e-5, atol=1e-5)
    np.testing.assert_allclose(np.asarray(logc32), np.asarray(r_logc), rtol=1e-5, atol=1e-5)

    # ---- bf16 MXU path (default): f32 accumulation + f32 epilogue ----
    params, cfg_b = prepare_params(w1, b1, w2, b2, mixture_components=K, output_dim=D,
                                   matmul_dtype=jnp.bfloat16)
    means, stddevs, log_coeffs = fwd(params, x, prior_low, prior_high, cfg=cfg_b)
    jax.block_until_ready((means, stddevs, log_coeffs))
    np.testing.assert_allclose(np.asarray(means), np.asarray(r_means), rtol=2e-2, atol=2e-2)
    np.testing.assert_allclose(np.asarray(stddevs), np.asarray(r_std), rtol=2e-2, atol=2e-2)
    np.testing.assert_allclose(np.asarray(log_coeffs), np.asarray(r_logc), rtol=2e-2, atol=2e-2)

    print("KERNEL_OK")
</pallas_src>

<mosaic_0001>
module attributes {stable_mosaic.version = 11 : i64} {
  func.func @_proposal_kernel(%arg0: i32, %arg1: memref<8x128xf32, #tpu.memory_space<vmem>>, %arg2: memref<128x128xf32, #tpu.memory_space<vmem>>, %arg3: memref<1x128xf32, #tpu.memory_space<vmem>>, %arg4: memref<128x384xf32, #tpu.memory_space<vmem>>, %arg5: memref<1x384xf32, #tpu.memory_space<vmem>>, %arg6: memref<128x128xf32, #tpu.memory_space<vmem>>, %arg7: memref<8x128xf32, #tpu.memory_space<vmem>>, %arg8: memref<8x128xf32, #tpu.memory_space<vmem>>, %arg9: memref<8x128xf32, #tpu.memory_space<vmem>>, %arg10: memref<8x128xf32, #tpu.memory_space<vmem>>, %arg11: memref<8x128xf32, #tpu.memory_space<vmem>>) attributes {dimension_semantics = [#tpu.dimension_semantics<parallel>], iteration_bounds = array<i64: 1>, scalar_prefetch = 0 : i64, scratch_operands = 0 : i64, tpu.core_type = #tpu.core_type<tc>, window_params = [{transform_indices = @transform_0, window_bounds = array<i64: 8, 128>}, {pipeline_mode = #tpu.pipeline_mode<synchronous>, transform_indices = @transform_1, window_bounds = array<i64: 128, 128>}, {pipeline_mode = #tpu.pipeline_mode<synchronous>, transform_indices = @transform_2, window_bounds = array<i64: 1, 128>}, {pipeline_mode = #tpu.pipeline_mode<synchronous>, transform_indices = @transform_3, window_bounds = array<i64: 128, 384>}, {pipeline_mode = #tpu.pipeline_mode<synchronous>, transform_indices = @transform_4, window_bounds = array<i64: 1, 384>}, {pipeline_mode = #tpu.pipeline_mode<synchronous>, transform_indices = @transform_5, window_bounds = array<i64: 128, 128>}, {transform_indices = @transform_6, window_bounds = array<i64: 8, 128>}, {transform_indices = @transform_7, window_bounds = array<i64: 8, 128>}, {transform_indices = @transform_8, window_bounds = array<i64: 8, 128>}, {transform_indices = @transform_9, window_bounds = array<i64: 8, 128>}, {transform_indices = @transform_10, window_bounds = array<i64: 8, 128>}]} {
    %c0 = arith.constant 0 : index
    %c0_0 = arith.constant 0 : index
    %0 = vector.load %arg1[%c0, %c0_0] : memref<8x128xf32, #tpu.memory_space<vmem>>, vector<8x128xf32>
    %c0_1 = arith.constant 0 : index
    %c0_2 = arith.constant 0 : index
    %1 = vector.load %arg2[%c0_1, %c0_2] : memref<128x128xf32, #tpu.memory_space<vmem>>, vector<128x128xf32>
    %cst = arith.constant dense<0.000000e+00> : vector<8x128xf32>
    %2 = tpu.matmul %0, %1, %cst {dimension_numbers = #tpu.dot_dimension_numbers<[1], [0], [0], [1], [0, 0, 1, 1], [], []>} : vector<8x128xf32>, vector<128x128xf32>, vector<8x128xf32> -> vector<8x128xf32>
    %c0_3 = arith.constant 0 : index
    %c0_4 = arith.constant 0 : index
    %3 = vector.load %arg3[%c0_3, %c0_4] : memref<1x128xf32, #tpu.memory_space<vmem>>, vector<1x128xf32>
    %4 = vector.broadcast %3 : vector<1x128xf32> to vector<8x128xf32>
    %5 = arith.addf %2, %4 : vector<8x128xf32>
    %cst_5 = arith.constant 0.000000e+00 : f32
    %6 = vector.broadcast %cst_5 : f32 to vector<8x128xf32>
    %7 = arith.maximumf %5, %6 : vector<8x128xf32>
    %c0_6 = arith.constant 0 : index
    %c0_7 = arith.constant 0 : index
    %8 = vector.load %arg4[%c0_6, %c0_7] : memref<128x384xf32, #tpu.memory_space<vmem>>, vector<128x384xf32>
    %cst_8 = arith.constant dense<0.000000e+00> : vector<8x384xf32>
    %9 = tpu.matmul %7, %8, %cst_8 {dimension_numbers = #tpu.dot_dimension_numbers<[1], [0], [0], [1], [0, 0, 1, 1], [], []>} : vector<8x128xf32>, vector<128x384xf32>, vector<8x384xf32> -> vector<8x384xf32>
    %c0_9 = arith.constant 0 : index
    %c0_10 = arith.constant 0 : index
    %10 = vector.load %arg5[%c0_9, %c0_10] : memref<1x384xf32, #tpu.memory_space<vmem>>, vector<1x384xf32>
    %11 = vector.broadcast %10 : vector<1x384xf32> to vector<8x384xf32>
    %12 = arith.addf %9, %11 : vector<8x384xf32>
    %13 = vector.extract_strided_slice %12 {offsets = [0, 0], sizes = [8, 128], strides = [1, 1]} : vector<8x384xf32> to vector<8x128xf32>
    %14 = vector.extract_strided_slice %12 {offsets = [0, 128], sizes = [8, 128], strides = [1, 1]} : vector<8x384xf32> to vector<8x128xf32>
    %15 = vector.extract_strided_slice %12 {offsets = [0, 256], sizes = [8, 128], strides = [1, 1]} : vector<8x384xf32> to vector<8x128xf32>
    %c0_11 = arith.constant 0 : index
    %c0_12 = arith.constant 0 : index
    %16 = vector.load %arg7[%c0_11, %c0_12] : memref<8x128xf32, #tpu.memory_space<vmem>>, vector<8x128xf32>
    %c0_13 = arith.constant 0 : index
    %c0_14 = arith.constant 0 : index
    %17 = vector.load %arg6[%c0_13, %c0_14] : memref<128x128xf32, #tpu.memory_space<vmem>>, vector<128x128xf32>
    %cst_15 = arith.constant dense<0.000000e+00> : vector<8x128xf32>
    %18 = tpu.matmul %16, %17, %cst_15 {dimension_numbers = #tpu.dot_dimension_numbers<[1], [0], [0], [1], [0, 0, 1, 1], [], []>} : vector<8x128xf32>, vector<128x128xf32>, vector<8x128xf32> -> vector<8x128xf32>
    %c0_16 = arith.constant 0 : index
    %c0_17 = arith.constant 0 : index
    %19 = vector.load %arg8[%c0_16, %c0_17] : memref<8x128xf32, #tpu.memory_space<vmem>>, vector<8x128xf32>
    %c0_18 = arith.constant 0 : index
    %c0_19 = arith.constant 0 : index
    %20 = vector.load %arg6[%c0_18, %c0_19] : memref<128x128xf32, #tpu.memory_space<vmem>>, vector<128x128xf32>
    %cst_20 = arith.constant dense<0.000000e+00> : vector<8x128xf32>
    %21 = tpu.matmul %19, %20, %cst_20 {dimension_numbers = #tpu.dot_dimension_numbers<[1], [0], [0], [1], [0, 0, 1, 1], [], []>} : vector<8x128xf32>, vector<128x128xf32>, vector<8x128xf32> -> vector<8x128xf32>
    %22 = arith.subf %21, %18 : vector<8x128xf32>
    %cst_21 = arith.constant 2.000000e+01 : f32
    %23 = vector.broadcast %cst_21 : f32 to vector<8x128xf32>
    %24 = arith.cmpf ogt, %14, %23 : vector<8x128xf32>
    %cst_22 = arith.constant 2.000000e+01 : f32
    %25 = vector.broadcast %cst_22 : f32 to vector<8x128xf32>
    %26 = arith.minimumf %14, %25 : vector<8x128xf32>
    %27 = math.exp %26 : vector<8x128xf32>
    %28 = math.log1p %27 : vector<8x128xf32>
    %29 = arith.select %24, %14, %28 : vector<8x128xi1>, vector<8x128xf32>
    %cst_23 = arith.constant dense<0xFF800000> : vector<8xf32>
    %30 = vector.multi_reduction <maximumf>, %15, %cst_23 [1] : vector<8x128xf32> to vector<8xf32>
    %31 = vector.shape_cast %30 : vector<8xf32> to vector<8x1xf32>
    %32 = vector.broadcast %31 : vector<8x1xf32> to vector<8x128xf32>
    %33 = arith.subf %15, %32 : vector<8x128xf32>
    %34 = math.exp %33 : vector<8x128xf32>
    %cst_24 = arith.constant dense<0.000000e+00> : vector<8xf32>
    %35 = vector.multi_reduction <add>, %34, %cst_24 [1] : vector<8x128xf32> to vector<8xf32>
    %36 = vector.shape_cast %35 : vector<8xf32> to vector<8x1xf32>
    %37 = math.log %36 : vector<8x1xf32>
    %38 = vector.broadcast %37 : vector<8x1xf32> to vector<8x128xf32>
    %39 = arith.subf %33, %38 : vector<8x128xf32>
    %40 = arith.mulf %13, %22 : vector<8x128xf32>
    %41 = arith.addf %18, %40 : vector<8x128xf32>
    %cst_25 = arith.constant 1.000000e+06 : f32
    %42 = vector.broadcast %cst_25 : f32 to vector<8x128xf32>
    %43 = arith.subf %18, %42 : vector<8x128xf32>
    %44 = arith.maximumf %41, %43 : vector<8x128xf32>
    %cst_26 = arith.constant 1.000000e+06 : f32
    %45 = vector.broadcast %cst_26 : f32 to vector<8x128xf32>
    %46 = arith.addf %21, %45 : vector<8x128xf32>
    %47 = arith.minimumf %44, %46 : vector<8x128xf32>
    %c0_27 = arith.constant 0 : index
    %c0_28 = arith.constant 0 : index
    %48 = vector.load %arg9[%c0_27, %c0_28] : memref<8x128xf32, #tpu.memory_space<vmem>>, vector<8x128xf32>
    tpu.vector_store %arg9[%c0_27, %c0_28], %47 {strides = array<i32>} : memref<8x128xf32, #tpu.memory_space<vmem>>, vector<8x128xf32>,
    %c0_29 = arith.constant 0 : index
    %c0_30 = arith.constant 0 : index
    %49 = vector.load %arg10[%c0_29, %c0_30] : memref<8x128xf32, #tpu.memory_space<vmem>>, vector<8x128xf32>
    tpu.vector_store %arg10[%c0_29, %c0_30], %29 {strides = array<i32>} : memref<8x128xf32, #tpu.memory_space<vmem>>, vector<8x128xf32>,
    %c0_31 = arith.constant 0 : index
    %c0_32 = arith.constant 0 : index
    %50 = vector.load %arg11[%c0_31, %c0_32] : memref<8x128xf32, #tpu.memory_space<vmem>>, vector<8x128xf32>
    tpu.vector_store %arg11[%c0_31, %c0_32], %39 {strides = array<i32>} : memref<8x128xf32, #tpu.memory_space<vmem>>, vector<8x128xf32>,
    return
  }
  func.func @transform_0(%arg0: i32) -> (i32, i32) {
    %c0_i32 = arith.constant 0 : i32
    %c0_i32_0 = arith.constant 0 : i32
    return %arg0, %c0_i32 : i32, i32
  }
  func.func @transform_1(%arg0: i32) -> (i32, i32) {
    %c0_i32 = arith.constant 0 : i32
    %c0_i32_0 = arith.constant 0 : i32
    %c0_i32_1 = arith.constant 0 : i32
    return %c0_i32, %c0_i32_0 : i32, i32
  }
  func.func @transform_2(%arg0: i32) -> (i32, i32) {
    %c0_i32 = arith.constant 0 : i32
    %c0_i32_0 = arith.constant 0 : i32
    %c0_i32_1 = arith.constant 0 : i32
    return %c0_i32, %c0_i32_0 : i32, i32
  }
  func.func @transform_3(%arg0: i32) -> (i32, i32) {
    %c0_i32 = arith.constant 0 : i32
    %c0_i32_0 = arith.constant 0 : i32
    %c0_i32_1 = arith.constant 0 : i32
    return %c0_i32, %c0_i32_0 : i32, i32
  }
  func.func @transform_4(%arg0: i32) -> (i32, i32) {
    %c0_i32 = arith.constant 0 : i32
    %c0_i32_0 = arith.constant 0 : i32
    %c0_i32_1 = arith.constant 0 : i32
    return %c0_i32, %c0_i32_0 : i32, i32
  }
  func.func @transform_5(%arg0: i32) -> (i32, i32) {
    %c0_i32 = arith.constant 0 : i32
    %c0_i32_0 = arith.constant 0 : i32
    %c0_i32_1 = arith.constant 0 : i32
    return %c0_i32, %c0_i32_0 : i32, i32
  }
  func.func @transform_6(%arg0: i32) -> (i32, i32) {
    %c0_i32 = arith.constant 0 : i32
    %c0_i32_0 = arith.constant 0 : i32
    return %arg0, %c0_i32 : i32, i32
  }
  func.func @transform_7(%arg0: i32) -> (i32, i32) {
    %c0_i32 = arith.constant 0 : i32
    %c0_i32_0 = arith.constant 0 : i32
    return %arg0, %c0_i32 : i32, i32
  }
  func.func @transform_8(%arg0: i32) -> (i32, i32) {
    %c0_i32 = arith.constant 0 : i32
    %c0_i32_0 = arith.constant 0 : i32
    return %arg0, %c0_i32 : i32, i32
  }
  func.func @transform_9(%arg0: i32) -> (i32, i32) {
    %c0_i32 = arith.constant 0 : i32
    %c0_i32_0 = arith.constant 0 : i32
    return %arg0, %c0_i32 : i32, i32
  }
  func.func @transform_10(%arg0: i32) -> (i32, i32) {
    %c0_i32 = arith.constant 0 : i32
    %c0_i32_0 = arith.constant 0 : i32
    return %arg0, %c0_i32 : i32, i32
  }
}

</mosaic_0001>

<llo_original>
// kernel: proposal_forward.1
$region0: #{proposal_forward.1}
  #allocation0 [shape = 'u32[]', space=smem, size = 0x4, offset = 0x4, fixed_abs, tag = 'smem constant byte address 0x4 - core index']
  #allocation1 [shape = 'u32[144,128]{1,0:T(1,128)}', space=vmem, size = 0x12000, scoped, tag = 'internal scratch']
  %s0 = inlined_call_operand.vmem [shape: f32[8,128], index: 0, kind: input, shape index: {}]
  %s1 = inlined_call_operand.hbm [shape: f32[128,128], index: 1, kind: input, shape index: {}]
  %s2 = inlined_call_operand.vmem [shape: f32[1,128], index: 2, kind: input, shape index: {}]
  %s3 = inlined_call_operand.hbm [shape: f32[128,384], index: 3, kind: input, shape index: {}]
  %s4 = inlined_call_operand.vmem [shape: f32[1,384], index: 4, kind: input, shape index: {}]
  %s5 = inlined_call_operand.hbm [shape: f32[128,128], index: 5, kind: input, shape index: {}]
  %s6 = inlined_call_operand.vmem [shape: f32[8,128], index: 6, kind: input, shape index: {}]
  %s7 = inlined_call_operand.vmem [shape: f32[8,128], index: 7, kind: input, shape index: {}]
  %s8 = inlined_call_operand.vmem [shape: f32[8,128], index: 8, kind: output, shape index: {0}]
  %s9 = inlined_call_operand.vmem [shape: f32[8,128], index: 9, kind: output, shape index: {1}]
  %s10 = inlined_call_operand.vmem [shape: f32[8,128], index: 10, kind: output, shape index: {2}]
  %11 = xla_tuple %s8, %s9, %s10
  %s12 = sld [smem:[#allocation0]]
  $region70: #{proposal_forward.1} parent=0
    _
  %s14 = ssub.s32 1, %s12
  %s15 = scalar_select 0, %s14, %s12
  $region1: #{proposal_forward.1} parent=0
    #allocation2 [shape = 'u8[65536]{0}', space=vmem, size = 0x10000, scoped, tag = 'input window, operand 1, single buffered']
    #allocation3 [shape = 's32[1]{0}', space=sflag, size = 0x4, scoped, tag = 'scoped memory for proposal_forward.1']
    #allocation4 [shape = 'u8[196608]{0}', space=vmem, size = 0x30000, scoped, tag = 'input window, operand 3, single buffered']
    #allocation5 [shape = 's32[1]{0}', space=sflag, size = 0x4, scoped, tag = 'scoped memory for proposal_forward.1']
    #allocation6 [shape = 'u8[65536]{0}', space=vmem, size = 0x10000, scoped, tag = 'input window, operand 5, single buffered']
    %16 = vsyncpa [#allocation3], 0
    %17 = vsyncpa [#allocation5], 0
    // Predicated region
    $region2: #{proposal_forward.1} parent=1 // pred_check
      _
    $region3: #{proposal_forward.1} parent=1 // pred_check_branch
      %19 = sbr.rel (0) target = $region5
    $region4: #{proposal_forward.1} parent=1 // pred_region
      _
    $region5: #{proposal_forward.1} parent=1 // pred_fallthru
      _
    // Predicated region
    $region6: #{proposal_forward.1} parent=1 // pred_check
      _
    $region7: #{proposal_forward.1} parent=1 // pred_check_branch
      %21 = sbr.rel (0) target = $region9
    $region8: #{proposal_forward.1} parent=1 // pred_region
      %s23 = ssub.s32 2048, 2048
      %24 = vsyncadd [#allocation3], %s23
      %s25 = sshll.u32 [#allocation2], 4
      %s26 = int_to_ptr.vmem [resolvable:$true] %s25
      %31 = dma.hbm_to_vmem [thread:$0]  %s1, 2048, %s26, [#allocation3], 128, 128, 8
    $region9: #{proposal_forward.1} parent=1 // pred_fallthru
      _
    // Predicated region
    $region10: #{proposal_forward.1} parent=1 // pred_check
      _
    $region11: #{proposal_forward.1} parent=1 // pred_check_branch
      %33 = sbr.rel (0) target = $region13
    $region12: #{proposal_forward.1} parent=1 // pred_region
      _
    $region13: #{proposal_forward.1} parent=1 // pred_fallthru
      _
    // Predicated region
    $region14: #{proposal_forward.1} parent=1 // pred_check
      _
    $region15: #{proposal_forward.1} parent=1 // pred_check_branch
      %35 = sbr.rel (0) target = $region17
    $region16: #{proposal_forward.1} parent=1 // pred_region
      %s37 = ssub.s32 6144, 6144
      %38 = vsyncadd [#allocation5], %s37
      %s39 = sshll.u32 [#allocation4], 4
      %s40 = int_to_ptr.vmem [resolvable:$true] %s39
      %45 = dma.hbm_to_vmem [thread:$0]  %s3, 6144, %s40, [#allocation5], 384, 384, 24
    $region17: #{proposal_forward.1} parent=1 // pred_fallthru
      _
    // Predicated region
    $region18: #{proposal_forward.1} parent=1 // pred_check
      _
    $region19: #{proposal_forward.1} parent=1 // pred_check_branch
      %47 = sbr.rel (0) target = $region21
    $region20: #{proposal_forward.1} parent=1 // pred_region
      _
    $region21: #{proposal_forward.1} parent=1 // pred_fallthru
      _
    // Predicated region
    $region22: #{proposal_forward.1} parent=1 // pred_check
      _
    $region23: #{proposal_forward.1} parent=1 // pred_check_branch
      %49 = sbr.rel (0) target = $region25
    $region24: #{proposal_forward.1} parent=1 // pred_region
      %s51 = ssub.s32 2048, 2048
      %52 = vsyncadd [#allocation5], %s51
      %s53 = sshll.u32 [#allocation6], 4
      %s54 = int_to_ptr.vmem [resolvable:$true] %s53
      %59 = dma.hbm_to_vmem [thread:$0]  %s5, 2048, %s54, [#allocation5], 128, 128, 8
    $region25: #{proposal_forward.1} parent=1 // pred_fallthru
      _
    // Predicated region
    $region26: #{proposal_forward.1} parent=1 // pred_check
      _
    $region27: #{proposal_forward.1} parent=1 // pred_check_branch
      %61 = sbr.rel (0) target = $region29
    $region28: #{proposal_forward.1} parent=1 // pred_region
      _
    $region29: #{proposal_forward.1} parent=1 // pred_fallthru
      _
    // Predicated region
    $region30: #{proposal_forward.1} parent=1 // pred_check
      _
    $region31: #{proposal_forward.1} parent=1 // pred_check_branch
      %63 = sbr.rel (0) target = $region33
    $region32: #{proposal_forward.1} parent=1 // pred_region
      _
    $region33: #{proposal_forward.1} parent=1 // pred_fallthru
      _
    // Predicated region
    $region34: #{proposal_forward.1} parent=1 // pred_check
      _
    $region35: #{proposal_forward.1} parent=1 // pred_check_branch
      %65 = sbr.rel (0) target = $region37
    $region36: #{proposal_forward.1} parent=1 // pred_region
      %66 = dma.done [#allocation3], 2048
    $region37: #{proposal_forward.1} parent=1 // pred_fallthru
      _
    // Predicated region
    $region38: #{proposal_forward.1} parent=1 // pred_check
      _
    $region39: #{proposal_forward.1} parent=1 // pred_check_branch
      %68 = sbr.rel (0) target = $region41
    $region40: #{proposal_forward.1} parent=1 // pred_region
      %69 = dma.done [#allocation5], 6144
    $region41: #{proposal_forward.1} parent=1 // pred_fallthru
      _
    // Predicated region
    $region42: #{proposal_forward.1} parent=1 // pred_check
      _
    $region43: #{proposal_forward.1} parent=1 // pred_check_branch
      %71 = sbr.rel (0) target = $region45
    $region44: #{proposal_forward.1} parent=1 // pred_region
      %72 = dma.done [#allocation5], 2048
    $region45: #{proposal_forward.1} parent=1 // pred_fallthru
      _
    %v73 = vld [vmem:[%s0] sm:$0xff]
    %v74 = vld [vmem:[#allocation2] sm:$0xff]
    %v75 = vld [vmem:[#allocation2 + $0x8] sm:$0xff]
    %v76 = vld [vmem:[#allocation2 + $0x10] sm:$0xff]
    %v77 = vld [vmem:[#allocation2 + $0x18] sm:$0xff]
    %v78 = vld [vmem:[#allocation2 + $0x20] sm:$0xff]
    %v79 = vld [vmem:[#allocation2 + $0x28] sm:$0xff]
    %v80 = vld [vmem:[#allocation2 + $0x30] sm:$0xff]
    %v81 = vld [vmem:[#allocation2 + $0x38] sm:$0xff]
    %v82 = vld [vmem:[#allocation2 + $0x40] sm:$0xff]
    %v83 = vld [vmem:[#allocation2 + $0x48] sm:$0xff]
    %v84 = vld [vmem:[#allocation2 + $0x50] sm:$0xff]
    %v85 = vld [vmem:[#allocation2 + $0x58] sm:$0xff]
    %v86 = vld [vmem:[#allocation2 + $0x60] sm:$0xff]
    %v87 = vld [vmem:[#allocation2 + $0x68] sm:$0xff]
    %v88 = vld [vmem:[#allocation2 + $0x70] sm:$0xff]
    %v89 = vld [vmem:[#allocation2 + $0x78] sm:$0xff]
    %v90 = vld [vmem:[%s2] sm:$0x1]
    %v92 = vlaneseq
    %v93 = vshrl.u32 %v92, 7
    %v94 = vsub.s32 0, %v93
    %v95 = vrot.slane %v90, %v94
    %97 = vmatprep.subr.mxu0 0.0
    %98 = vmatpush1.msra.mxu0 %v74
    %99 = vmatprep.subr.mxu0 0.0
    %100 = vmatpush1.msra.mxu0 %v75
    %101 = vmatprep.subr.mxu0 0.0
    %102 = vmatpush1.msra.mxu0 %v76
    %103 = vmatprep.subr.mxu0 0.0
    %104 = vmatpush1.msra.mxu0 %v77
    %105 = vmatprep.subr.mxu0 0.0
    %106 = vmatpush1.msra.mxu0 %v78
    %107 = vmatprep.subr.mxu0 0.0
    %108 = vmatpush1.msra.mxu0 %v79
    %109 = vmatprep.subr.mxu0 0.0
    %110 = vmatpush1.msra.mxu0 %v80
    %111 = vmatprep.subr.mxu0 0.0
    %112 = vmatpush1.msra.mxu0 %v81
    %113 = vmatprep.subr.mxu0 0.0
    %114 = vmatpush1.msra.mxu0 %v82
    %115 = vmatprep.subr.mxu0 0.0
    %116 = vmatpush1.msra.mxu0 %v83
    %117 = vmatprep.subr.mxu0 0.0
    %118 = vmatpush1.msra.mxu0 %v84
    %119 = vmatprep.subr.mxu0 0.0
    %120 = vmatpush1.msra.mxu0 %v85
    %121 = vmatprep.subr.mxu0 0.0
    %122 = vmatpush1.msra.mxu0 %v86
    %123 = vmatprep.subr.mxu0 0.0
    %124 = vmatpush1.msra.mxu0 %v87
    %125 = vmatprep.subr.mxu0 0.0
    %126 = vmatpush1.msra.mxu0 %v88
    %127 = vmatprep.subr.mxu0 0.0
    %128 = vmatpush1.msra.mxu0 %v89
    %129 = vmatprep.subr.mxu0 0.0
    %130 = vmatpush1.msra.mxu0 0.0
    %131 = vmatprep.subr.mxu0 0.0
    %132 = vmatpush1.msra.mxu0 0.0
    %133 = vmatprep.subr.mxu0 0.0
    %134 = vmatpush1.msra.mxu0 0.0
    %135 = vmatprep.subr.mxu0 0.0
    %136 = vmatpush1.msra.mxu0 0.0
    %137 = vmatprep.subr.mxu0 0.0
    %138 = vmatpush1.msra.mxu0 0.0
    %139 = vmatprep.subr.mxu0 0.0
    %140 = vmatpush1.msra.mxu0 0.0
    %141 = vmatprep.subr.mxu0 0.0
    %142 = vmatpush1.msra.mxu0 0.0
    %143 = vmatprep.subr.mxu0 0.0
    %144 = vmatpush1.msra.mxu0 0.0
    %145 = vmatprep.subr.mxu0 0.0
    %146 = vmatpush1.msra.mxu0 0.0
    %147 = vmatprep.subr.mxu0 0.0
    %148 = vmatpush1.msra.mxu0 0.0
    %149 = vmatprep.subr.mxu0 0.0
    %150 = vmatpush1.msra.mxu0 0.0
    %151 = vmatprep.subr.mxu0 0.0
    %152 = vmatpush1.msra.mxu0 0.0
    %153 = vmatprep.subr.mxu0 0.0
    %154 = vmatpush1.msra.mxu0 0.0
    %155 = vmatprep.subr.mxu0 0.0
    %156 = vmatpush1.msra.mxu0 0.0
    %157 = vmatprep.subr.mxu0 0.0
    %158 = vmatpush1.msra.mxu0 0.0
    %159 = vmatprep.subr.mxu0 0.0
    %160 = vmatpush1.msra.mxu0 0.0
    %161 = vmatprep.mubr.f32.mxu0 0.0
    %162 = vmatmul.mubr.f32.gmra.mrb[0].mxu0 %v73
    %v163 = vpop.f32.mrb[0].mxu0
    %v164 = vadd.f32 %v95, %v163
    %v165 = vpop.f32.mrb[0].mxu0
    %166 = vdwg.mxu0
    %v167 = vmax.f32 %v164, 0.0
    %v168 = vld [vmem:[#allocation4] sm:$0xff]
    %v169 = vld [vmem:[#allocation4 + $0x8] sm:$0xff]
    %v170 = vld [vmem:[#allocation4 + $0x10] sm:$0xff]
    %v171 = vld [vmem:[#allocation4 + $0x18] sm:$0xff]
    %v172 = vld [vmem:[#allocation4 + $0x20] sm:$0xff]
    %v173 = vld [vmem:[#allocation4 + $0x28] sm:$0xff]
    %v174 = vld [vmem:[#allocation4 + $0x30] sm:$0xff]
    %v175 = vld [vmem:[#allocation4 + $0x38] sm:$0xff]
    %v176 = vld [vmem:[#allocation4 + $0x40] sm:$0xff]
    %v177 = vld [vmem:[#allocation4 + $0x48] sm:$0xff]
    %v178 = vld [vmem:[#allocation4 + $0x50] sm:$0xff]
    %v179 = vld [vmem:[#allocation4 + $0x58] sm:$0xff]
    %v180 = vld [vmem:[#allocation4 + $0x60] sm:$0xff]
    %v181 = vld [vmem:[#allocation4 + $0x68] sm:$0xff]
    %v182 = vld [vmem:[#allocation4 + $0x70] sm:$0xff]
    %v183 = vld [vmem:[#allocation4 + $0x78] sm:$0xff]
    %v184 = vld [vmem:[#allocation4 + $0x80] sm:$0xff]
    %v185 = vld [vmem:[#allocation4 + $0x88] sm:$0xff]
    %v186 = vld [vmem:[#allocation4 + $0x90] sm:$0xff]
    %v187 = vld [vmem:[#allocation4 + $0x98] sm:$0xff]
    %v188 = vld [vmem:[#allocation4 + $0xa0] sm:$0xff]
    %v189 = vld [vmem:[#allocation4 + $0xa8] sm:$0xff]
    %v190 = vld [vmem:[#allocation4 + $0xb0] sm:$0xff]
    %v191 = vld [vmem:[#allocation4 + $0xb8] sm:$0xff]
    %v192 = vld [vmem:[#allocation4 + $0xc0] sm:$0xff]
    %v193 = vld [vmem:[#allocation4 + $0xc8] sm:$0xff]
    %v194 = vld [vmem:[#allocation4 + $0xd0] sm:$0xff]
    %v195 = vld [vmem:[#allocation4 + $0xd8] sm:$0xff]
    %v196 = vld [vmem:[#allocation4 + $0xe0] sm:$0xff]
    %v197 = vld [vmem:[#allocation4 + $0xe8] sm:$0xff]
    %v198 = vld [vmem:[#allocation4 + $0xf0] sm:$0xff]
    %v199 = vld [vmem:[#allocation4 + $0xf8] sm:$0xff]
    %v200 = vld [vmem:[#allocation4 + $0x100] sm:$0xff]
    %v201 = vld [vmem:[#allocation4 + $0x108] sm:$0xff]
    %v202 = vld [vmem:[#allocation4 + $0x110] sm:$0xff]
    %v203 = vld [vmem:[#allocation4 + $0x118] sm:$0xff]
    %v204 = vld [vmem:[#allocation4 + $0x120] sm:$0xff]
    %v205 = vld [vmem:[#allocation4 + $0x128] sm:$0xff]
    %v206 = vld [vmem:[#allocation4 + $0x130] sm:$0xff]
    %v207 = vld [vmem:[#allocation4 + $0x138] sm:$0xff]
    %v208 = vld [vmem:[#allocation4 + $0x140] sm:$0xff]
    %v209 = vld [vmem:[#allocation4 + $0x148] sm:$0xff]
    %v210 = vld [vmem:[#allocation4 + $0x150] sm:$0xff]
    %v211 = vld [vmem:[#allocation4 + $0x158] sm:$0xff]
    %v212 = vld [vmem:[#allocation4 + $0x160] sm:$0xff]
    %v213 = vld [vmem:[#allocation4 + $0x168] sm:$0xff]
    %v214 = vld [vmem:[#allocation4 + $0x170] sm:$0xff]
    %v215 = vld [vmem:[#allocation4 + $0x178] sm:$0xff]
    %v216 = vld [vmem:[%s4] sm:$0x7]
    %v218 = vlaneseq
    %v219 = vshrl.u32 %v218, 7
    %v220 = vsub.s32 0, %v219
    %v221 = vrot.slane %v216, %v220
    %v222 = vlaneseq
    %v223 = vshrl.u32 %v222, 7
    %v224 = vsub.s32 1, %v223
    %v225 = vrot.slane %v216, %v224
    %v226 = vlaneseq
    %v227 = vshrl.u32 %v226, 7
    %v228 = vsub.s32 2, %v227
    %v229 = vrot.slane %v216, %v228
    %233 = vmatprep.subr.mxu0 %v169
    %234 = vmatpush1.msra.mxu0 %v168
    %235 = vmatprep.subr.mxu0 %v172
    %236 = vmatpush1.msra.mxu0 %v171
    %237 = vmatprep.subr.mxu0 %v175
    %238 = vmatpush1.msra.mxu0 %v174
    %239 = vmatprep.subr.mxu0 %v178
    %240 = vmatpush1.msra.mxu0 %v177
    %241 = vmatprep.subr.mxu0 %v181
    %242 = vmatpush1.msra.mxu0 %v180
    %243 = vmatprep.subr.mxu0 %v184
    %244 = vmatpush1.msra.mxu0 %v183
    %245 = vmatprep.subr.mxu0 %v187
    %246 = vmatpush1.msra.mxu0 %v186
    %247 = vmatprep.subr.mxu0 %v190
    %248 = vmatpush1.msra.mxu0 %v189
    %249 = vmatprep.subr.mxu0 %v193
    %250 = vmatpush1.msra.mxu0 %v192
    %251 = vmatprep.subr.mxu0 %v196
    %252 = vmatpush1.msra.mxu0 %v195
    %253 = vmatprep.subr.mxu0 %v199
    %254 = vmatpush1.msra.mxu0 %v198
    %255 = vmatprep.subr.mxu0 %v202
    %256 = vmatpush1.msra.mxu0 %v201
    %257 = vmatprep.subr.mxu0 %v205
    %258 = vmatpush1.msra.mxu0 %v204
    %259 = vmatprep.subr.mxu0 %v208
    %260 = vmatpush1.msra.mxu0 %v207
    %261 = vmatprep.subr.mxu0 %v211
    %262 = vmatpush1.msra.mxu0 %v210
    %263 = vmatprep.subr.mxu0 %v214
    %264 = vmatpush1.msra.mxu0 %v213
    %265 = vmatprep.subr.mxu0 0.0
    %266 = vmatpush1.msra.mxu0 0.0
    %267 = vmatprep.subr.mxu0 0.0
    %268 = vmatpush1.msra.mxu0 0.0
    %269 = vmatprep.subr.mxu0 0.0
    %270 = vmatpush1.msra.mxu0 0.0
    %271 = vmatprep.subr.mxu0 0.0
    %272 = vmatpush1.msra.mxu0 0.0
    %273 = vmatprep.subr.mxu0 0.0
    %274 = vmatpush1.msra.mxu0 0.0
    %275 = vmatprep.subr.mxu0 0.0
    %276 = vmatpush1.msra.mxu0 0.0
    %277 = vmatprep.subr.mxu0 0.0
    %278 = vmatpush1.msra.mxu0 0.0
    %279 = vmatprep.subr.mxu0 0.0
    %280 = vmatpush1.msra.mxu0 0.0
    %281 = vmatprep.subr.mxu0 0.0
    %282 = vmatpush1.msra.mxu0 0.0
    %283 = vmatprep.subr.mxu0 0.0
    %284 = vmatpush1.msra.mxu0 0.0
    %285 = vmatprep.subr.mxu0 0.0
    %286 = vmatpush1.msra.mxu0 0.0
    %287 = vmatprep.subr.mxu0 0.0
    %288 = vmatpush1.msra.mxu0 0.0
    %289 = vmatprep.subr.mxu0 0.0
    %290 = vmatpush1.msra.mxu0 0.0
    %291 = vmatprep.subr.mxu0 0.0
    %292 = vmatpush1.msra.mxu0 0.0
    %293 = vmatprep.subr.mxu0 0.0
    %294 = vmatpush1.msra.mxu0 0.0
    %295 = vmatprep.subr.mxu0 0.0
    %296 = vmatpush1.msra.mxu0 0.0
    %297 = vmatprep.mubr.f32.mxu0 0.0
    %298 = vmatmul.mubr.f32.gmra.mrb[0].mxu0 %v167
    %v299 = vpop.f32.mrb[0].mxu0
    %v300 = vadd.f32 %v221, %v299
    %v301 = vpop.f32.mrb[0].mxu0
    %v302 = vadd.f32 %v225, %v301
    %303 = vdwg.mxu0
    %304 = vmatprep.subr.mxu0 0.0
    %305 = vmatpush1.msra.mxu0 %v170
    %306 = vmatprep.subr.mxu0 0.0
    %307 = vmatpush1.msra.mxu0 %v173
    %308 = vmatprep.subr.mxu0 0.0
    %309 = vmatpush1.msra.mxu0 %v176
    %310 = vmatprep.subr.mxu0 0.0
    %311 = vmatpush1.msra.mxu0 %v179
    %312 = vmatprep.subr.mxu0 0.0
    %313 = vmatpush1.msra.mxu0 %v182
    %314 = vmatprep.subr.mxu0 0.0
    %315 = vmatpush1.msra.mxu0 %v185
    %316 = vmatprep.subr.mxu0 0.0
    %317 = vmatpush1.msra.mxu0 %v188
    %318 = vmatprep.subr.mxu0 0.0
    %319 = vmatpush1.msra.mxu0 %v191
    %320 = vmatprep.subr.mxu0 0.0
    %321 = vmatpush1.msra.mxu0 %v194
    %322 = vmatprep.subr.mxu0 0.0
    %323 = vmatpush1.msra.mxu0 %v197
    %324 = vmatprep.subr.mxu0 0.0
    %325 = vmatpush1.msra.mxu0 %v200
    %326 = vmatprep.subr.mxu0 0.0
    %327 = vmatpush1.msra.mxu0 %v203
    %328 = vmatprep.subr.mxu0 0.0
    %329 = vmatpush1.msra.mxu0 %v206
    %330 = vmatprep.subr.mxu0 0.0
    %331 = vmatpush1.msra.mxu0 %v209
    %332 = vmatprep.subr.mxu0 0.0
    %333 = vmatpush1.msra.mxu0 %v212
    %334 = vmatprep.subr.mxu0 0.0
    %335 = vmatpush1.msra.mxu0 %v215
    %336 = vmatprep.subr.mxu0 0.0
    %337 = vmatpush1.msra.mxu0 0.0
    %338 = vmatprep.subr.mxu0 0.0
    %339 = vmatpush1.msra.mxu0 0.0
    %340 = vmatprep.subr.mxu0 0.0
    %341 = vmatpush1.msra.mxu0 0.0
    %342 = vmatprep.subr.mxu0 0.0
    %343 = vmatpush1.msra.mxu0 0.0
    %344 = vmatprep.subr.mxu0 0.0
    %345 = vmatpush1.msra.mxu0 0.0
    %346 = vmatprep.subr.mxu0 0.0
    %347 = vmatpush1.msra.mxu0 0.0
    %348 = vmatprep.subr.mxu0 0.0
    %349 = vmatpush1.msra.mxu0 0.0
    %350 = vmatprep.subr.mxu0 0.0
    %351 = vmatpush1.msra.mxu0 0.0
    %352 = vmatprep.subr.mxu0 0.0
    %353 = vmatpush1.msra.mxu0 0.0
    %354 = vmatprep.subr.mxu0 0.0
    %355 = vmatpush1.msra.mxu0 0.0
    %356 = vmatprep.subr.mxu0 0.0
    %357 = vmatpush1.msra.mxu0 0.0
    %358 = vmatprep.subr.mxu0 0.0
    %359 = vmatpush1.msra.mxu0 0.0
    %360 = vmatprep.subr.mxu0 0.0
    %361 = vmatpush1.msra.mxu0 0.0
    %362 = vmatprep.subr.mxu0 0.0
    %363 = vmatpush1.msra.mxu0 0.0
    %364 = vmatprep.subr.mxu0 0.0
    %365 = vmatpush1.msra.mxu0 0.0
    %366 = vmatprep.subr.mxu0 0.0
    %367 = vmatpush1.msra.mxu0 0.0
    %368 = vmatprep.mubr.f32.mxu0 0.0
    %369 = vmatmul.mubr.f32.gmra.mrb[0].mxu0 %v167
    %v370 = vpop.f32.mrb[0].mxu0
    %v371 = vadd.f32 %v229, %v370
    %v372 = vpop.f32.mrb[0].mxu0
    %373 = vdwg.mxu0
    %v374 = vld [vmem:[%s6] sm:$0xff]
    %v375 = vld [vmem:[#allocation6] sm:$0xff]
    %v376 = vld [vmem:[#allocation6 + $0x8] sm:$0xff]
    %v377 = vld [vmem:[#allocation6 + $0x10] sm:$0xff]
    %v378 = vld [vmem:[#allocation6 + $0x18] sm:$0xff]
    %v379 = vld [vmem:[#allocation6 + $0x20] sm:$0xff]
    %v380 = vld [vmem:[#allocation6 + $0x28] sm:$0xff]
    %v381 = vld [vmem:[#allocation6 + $0x30] sm:$0xff]
    %v382 = vld [vmem:[#allocation6 + $0x38] sm:$0xff]
    %v383 = vld [vmem:[#allocation6 + $0x40] sm:$0xff]
    %v384 = vld [vmem:[#allocation6 + $0x48] sm:$0xff]
    %v385 = vld [vmem:[#allocation6 + $0x50] sm:$0xff]
    %v386 = vld [vmem:[#allocation6 + $0x58] sm:$0xff]
    %v387 = vld [vmem:[#allocation6 + $0x60] sm:$0xff]
    %v388 = vld [vmem:[#allocation6 + $0x68] sm:$0xff]
    %v389 = vld [vmem:[#allocation6 + $0x70] sm:$0xff]
    %v390 = vld [vmem:[#allocation6 + $0x78] sm:$0xff]
    %391 = vmatprep.subr.mxu0 0.0
    %392 = vmatpush1.msra.mxu0 %v375
    %393 = vmatprep.subr.mxu0 0.0
    %394 = vmatpush1.msra.mxu0 %v376
    %395 = vmatprep.subr.mxu0 0.0
    %396 = vmatpush1.msra.mxu0 %v377
    %397 = vmatprep.subr.mxu0 0.0
    %398 = vmatpush1.msra.mxu0 %v378
    %399 = vmatprep.subr.mxu0 0.0
    %400 = vmatpush1.msra.mxu0 %v379
    %401 = vmatprep.subr.mxu0 0.0
    %402 = vmatpush1.msra.mxu0 %v380
    %403 = vmatprep.subr.mxu0 0.0
    %404 = vmatpush1.msra.mxu0 %v381
    %405 = vmatprep.subr.mxu0 0.0
    %406 = vmatpush1.msra.mxu0 %v382
    %407 = vmatprep.subr.mxu0 0.0
    %408 = vmatpush1.msra.mxu0 %v383
    %409 = vmatprep.subr.mxu0 0.0
    %410 = vmatpush1.msra.mxu0 %v384
    %411 = vmatprep.subr.mxu0 0.0
    %412 = vmatpush1.msra.mxu0 %v385
    %413 = vmatprep.subr.mxu0 0.0
    %414 = vmatpush1.msra.mxu0 %v386
    %415 = vmatprep.subr.mxu0 0.0
    %416 = vmatpush1.msra.mxu0 %v387
    %417 = vmatprep.subr.mxu0 0.0
    %418 = vmatpush1.msra.mxu0 %v388
    %419 = vmatprep.subr.mxu0 0.0
    %420 = vmatpush1.msra.mxu0 %v389
    %421 = vmatprep.subr.mxu0 0.0
    %422 = vmatpush1.msra.mxu0 %v390
    %423 = vmatprep.subr.mxu0 0.0
    %424 = vmatpush1.msra.mxu0 0.0
    %425 = vmatprep.subr.mxu0 0.0
    %426 = vmatpush1.msra.mxu0 0.0
    %427 = vmatprep.subr.mxu0 0.0
    %428 = vmatpush1.msra.mxu0 0.0
    %429 = vmatprep.subr.mxu0 0.0
    %430 = vmatpush1.msra.mxu0 0.0
    %431 = vmatprep.subr.mxu0 0.0
    %432 = vmatpush1.msra.mxu0 0.0
    %433 = vmatprep.subr.mxu0 0.0
    %434 = vmatpush1.msra.mxu0 0.0
    %435 = vmatprep.subr.mxu0 0.0
    %436 = vmatpush1.msra.mxu0 0.0
    %437 = vmatprep.subr.mxu0 0.0
    %438 = vmatpush1.msra.mxu0 0.0
    %439 = vmatprep.subr.mxu0 0.0
    %440 = vmatpush1.msra.mxu0 0.0
    %441 = vmatprep.subr.mxu0 0.0
    %442 = vmatpush1.msra.mxu0 0.0
    %443 = vmatprep.subr.mxu0 0.0
    %444 = vmatpush1.msra.mxu0 0.0
    %445 = vmatprep.subr.mxu0 0.0
    %446 = vmatpush1.msra.mxu0 0.0
    %447 = vmatprep.subr.mxu0 0.0
    %448 = vmatpush1.msra.mxu0 0.0
    %449 = vmatprep.subr.mxu0 0.0
    %450 = vmatpush1.msra.mxu0 0.0
    %451 = vmatprep.subr.mxu0 0.0
    %452 = vmatpush1.msra.mxu0 0.0
    %453 = vmatprep.subr.mxu0 0.0
    %454 = vmatpush1.msra.mxu0 0.0
    %455 = vmatprep.mubr.f32.mxu0 0.0
    %456 = vmatmul.mubr.f32.gmra.mrb[0].mxu0 %v374
    %v457 = vpop.f32.mrb[0].mxu0
    %v458 = vadd.f32 0.0, %v457
    %v459 = vpop.f32.mrb[0].mxu0
    %460 = vdwg.mxu0
    %v461 = vld [vmem:[%s7] sm:$0xff]
    %462 = vmatprep.subr.mxu0 0.0
    %463 = vmatpush1.msra.mxu0 %v375
    %464 = vmatprep.subr.mxu0 0.0
    %465 = vmatpush1.msra.mxu0 %v376
    %466 = vmatprep.subr.mxu0 0.0
    %467 = vmatpush1.msra.mxu0 %v377
    %468 = vmatprep.subr.mxu0 0.0
    %469 = vmatpush1.msra.mxu0 %v378
    %470 = vmatprep.subr.mxu0 0.0
    %471 = vmatpush1.msra.mxu0 %v379
    %472 = vmatprep.subr.mxu0 0.0
    %473 = vmatpush1.msra.mxu0 %v380
    %474 = vmatprep.subr.mxu0 0.0
    %475 = vmatpush1.msra.mxu0 %v381
    %476 = vmatprep.subr.mxu0 0.0
    %477 = vmatpush1.msra.mxu0 %v382
    %478 = vmatprep.subr.mxu0 0.0
    %479 = vmatpush1.msra.mxu0 %v383
    %480 = vmatprep.subr.mxu0 0.0
    %481 = vmatpush1.msra.mxu0 %v384
    %482 = vmatprep.subr.mxu0 0.0
    %483 = vmatpush1.msra.mxu0 %v385
    %484 = vmatprep.subr.mxu0 0.0
    %485 = vmatpush1.msra.mxu0 %v386
    %486 = vmatprep.subr.mxu0 0.0
    %487 = vmatpush1.msra.mxu0 %v387
    %488 = vmatprep.subr.mxu0 0.0
    %489 = vmatpush1.msra.mxu0 %v388
    %490 = vmatprep.subr.mxu0 0.0
    %491 = vmatpush1.msra.mxu0 %v389
    %492 = vmatprep.subr.mxu0 0.0
    %493 = vmatpush1.msra.mxu0 %v390
    %494 = vmatprep.subr.mxu0 0.0
    %495 = vmatpush1.msra.mxu0 0.0
    %496 = vmatprep.subr.mxu0 0.0
    %497 = vmatpush1.msra.mxu0 0.0
    %498 = vmatprep.subr.mxu0 0.0
    %499 = vmatpush1.msra.mxu0 0.0
    %500 = vmatprep.subr.mxu0 0.0
    %501 = vmatpush1.msra.mxu0 0.0
    %502 = vmatprep.subr.mxu0 0.0
    %503 = vmatpush1.msra.mxu0 0.0
    %504 = vmatprep.subr.mxu0 0.0
    %505 = vmatpush1.msra.mxu0 0.0
    %506 = vmatprep.subr.mxu0 0.0
    %507 = vmatpush1.msra.mxu0 0.0
    %508 = vmatprep.subr.mxu0 0.0
    %509 = vmatpush1.msra.mxu0 0.0
    %510 = vmatprep.subr.mxu0 0.0
    %511 = vmatpush1.msra.mxu0 0.0
    %512 = vmatprep.subr.mxu0 0.0
    %513 = vmatpush1.msra.mxu0 0.0
    %514 = vmatprep.subr.mxu0 0.0
    %515 = vmatpush1.msra.mxu0 0.0
    %516 = vmatprep.subr.mxu0 0.0
    %517 = vmatpush1.msra.mxu0 0.0
    %518 = vmatprep.subr.mxu0 0.0
    %519 = vmatpush1.msra.mxu0 0.0
    %520 = vmatprep.subr.mxu0 0.0
    %521 = vmatpush1.msra.mxu0 0.0
    %522 = vmatprep.subr.mxu0 0.0
    %523 = vmatpush1.msra.mxu0 0.0
    %524 = vmatprep.subr.mxu0 0.0
    %525 = vmatpush1.msra.mxu0 0.0
    %526 = vmatprep.mubr.f32.mxu0 0.0
    %527 = vmatmul.mubr.f32.gmra.mrb[0].mxu0 %v461
    %v528 = vpop.f32.mrb[0].mxu0
    %v529 = vadd.f32 0.0, %v528
    %v530 = vpop.f32.mrb[0].mxu0
    %531 = vdwg.mxu0
    %v532 = vsub.f32 %v529, %v458
    %vm533 = vcmp.gt.f32.partialorder %v302, 20.0
    %v534 = vmin.f32 %v302, 20.0
    %v535 = vmul.f32 %v534, 1.442695
    %v536 = vpow.pop %v535
    %v537 = vadd.f32 %v536, 1.0
    %v538 = vlog2.pop %v537
    %v539 = vmul.f32 %v538, 0.6931472
    %v540 = vmul.f32 -0.5, %v536
    %v541 = vadd.f32 %v540, 1.0
    %v542 = vmul.f32 %v541, %v536
    %v543 = vand.u32 2147483647, %v536
    %vm544 = vcmp.lt.f32.partialorder %v543, 0.0004427343
    %v545 = vsel %vm544, %v542, %v539
    %v546 = vsel %vm533, %v302, %v545
    %547 = vmax.xlane.f32.xlu0 %v371
    %v548 = vpop.xlane.xlu0 %547
    %v549 = vsub.f32 %v371, %v548
    %v550 = vmul.f32 %v549, 1.442695
    %v551 = vpow.pop %v550
    %552 = vadd.xlane.f32.xlu0 %v551
    %v553 = vpop.xlane.xlu0 %552
    %v554 = vlog2.pop %v553
    %v555 = vmul.f32 %v554, 0.6931472
    %v556 = vsub.f32 %v549, %v555
    %v557 = vmul.f32 %v300, %v532
    %v558 = vadd.f32 %v458, %v557
    %v559 = vsub.f32 %v458, 1000000.0
    %v560 = vmax.f32 %v558, %v559
    %v561 = vadd.f32 %v529, 1000000.0
    %v562 = vmin.f32 %v560, %v561
    %563 = vst [vmem:[%s8] sm:$0xff] %v562
    %564 = vst [vmem:[%s9] sm:$0xff] %v546
    %565 = vst [vmem:[%s10] sm:$0xff] %v556
    // Predicated region
    $region46: #{proposal_forward.1} parent=1 // pred_check
      _
    $region47: #{proposal_forward.1} parent=1 // pred_check_branch
      %567 = sbr.rel (0) target = $region49
    $region48: #{proposal_forward.1} parent=1 // pred_region
      _
    $region49: #{proposal_forward.1} parent=1 // pred_fallthru
      _
    // Predicated region
    $region50: #{proposal_forward.1} parent=1 // pred_check
      _
    $region51: #{proposal_forward.1} parent=1 // pred_check_branch
      %569 = sbr.rel (0) target = $region53
    $region52: #{proposal_forward.1} parent=1 // pred_region
      _
    $region53: #{proposal_forward.1} parent=1 // pred_fallthru
      _
    // Predicated region
    $region54: #{proposal_forward.1} parent=1 // pred_check
      _
    $region55: #{proposal_forward.1} parent=1 // pred_check_branch
      %571 = sbr.rel (0) target = $region57
    $region56: #{proposal_forward.1} parent=1 // pred_region
      _
    $region57: #{proposal_forward.1} parent=1 // pred_fallthru
      _
    // Predicated region
    $region58: #{proposal_forward.1} parent=1 // pred_check
      _
    $region59: #{proposal_forward.1} parent=1 // pred_check_branch
      %573 = sbr.rel (0) target = $region61
    $region60: #{proposal_forward.1} parent=1 // pred_region
      _
    $region61: #{proposal_forward.1} parent=1 // pred_fallthru
      _
    // Predicated region
    $region62: #{proposal_forward.1} parent=1 // pred_check
      _
    $region63: #{proposal_forward.1} parent=1 // pred_check_branch
      %575 = sbr.rel (0) target = $region65
    $region64: #{proposal_forward.1} parent=1 // pred_region
      _
    $region65: #{proposal_forward.1} parent=1 // pred_fallthru
      _
    // Predicated region
    $region66: #{proposal_forward.1} parent=1 // pred_check
      _
    $region67: #{proposal_forward.1} parent=1 // pred_check_branch
      %577 = sbr.rel (0) target = $region69
    $region68: #{proposal_forward.1} parent=1 // pred_region
      _
    $region69: #{proposal_forward.1} parent=1 // pred_fallthru
      _
    %578 = vsyncpa [#allocation3], 1
    %579 = vsyncpa [#allocation5], 1

</llo_original>
